<compile_context>
chip_gen: v5e
topology: v5e:2x2
jax: 0.10.0
libtpu: 0.0.40
codegen_flags: <defaults>
</compile_context>

<pallas_src>
import functools

import numpy as np
import jax
import jax.numpy as jnp
from jax.experimental import pallas as pl
from jax.experimental.pallas import tpu as pltpu

_LANE = 128
_SUBLANE = 8
_TARGET_BLOCK_BYTES = 4 << 20            # ~4 MiB output tile
_FOOTPRINT_BYTES = 24 * 1024 * 1024      # double-buffered in+out VMEM budget
_VMEM_LIMIT_BYTES = 32 * 1024 * 1024     # safe on v5e/v6e/v7x


def _round_up(x, m):
    return (x + m - 1) // m * m


def _cdiv(a, b):
    return -(-a // b)


def _sublane_multiple(elem_bytes):
    # Native sublane packing: 8 rows for 32-bit, 16 for bf16, 32 for int8/fp8.
    return max(_SUBLANE, 32 // max(1, elem_bytes))


def _pick_row_tile(rows, out_lane_width, elem_bytes):
    """Row tile aiming for ~_TARGET_BLOCK_BYTES output blocks, multiple of the
    dtype's sublane packing, balanced across grid steps, with the
    double-buffered (output + lane-padded int32 index) footprint capped."""
    out_row = out_lane_width * elem_bytes
    in_row = _LANE * 4                     # idx block is lane-padded to 128 in VMEM
    sub = _sublane_multiple(elem_bytes)
    max_tn = min(_TARGET_BLOCK_BYTES // out_row,
                 _FOOTPRINT_BYTES // (2 * (out_row + in_row)))
    max_tn = max(sub, max_tn // sub * sub)
    if rows <= max_tn:
        # Single block covering the whole row extent (full-dim exception to
        # the (8,128) block-shape rule), so tiny inputs need no padding.
        return rows
    nblocks = _cdiv(rows, max_tn)
    return _round_up(_cdiv(rows, nblocks), sub)


def _one_hot_packed_kernel(idx_ref, expand_ref, out_ref, *, depth):
    # idx_ref: (tn, groups) int32; expand_ref: (groups, 128) f32 with
    # E[g, l] = [l // depth == g]; out_ref: (tn, 128 = groups*depth).
    # expanded[r, l] = idx[r, l // depth] via one MXU matmul (free slot here),
    # then a single compare against lane % depth.  Negative / >= depth indices
    # never equal lane % depth in [0, depth), so no masking is needed.
    tn = out_ref.shape[0]
    idx_f = idx_ref[...].astype(jnp.float32)                       # (tn, groups)
    expanded = jnp.dot(idx_f, expand_ref[...],
                       preferred_element_type=jnp.float32)         # (tn, 128)
    lane_mod = jax.lax.broadcasted_iota(jnp.int32, (tn, _LANE), 1) % depth
    out_ref[...] = (expanded == lane_mod.astype(jnp.float32)).astype(out_ref.dtype)


def _one_hot_tiled_kernel(idx_ref, out_ref):
    # idx_ref: (tn, 1) int32; out_ref: (tn, td).  Depth tile j covers lanes
    # [j*td, (j+1)*td).  Lanes >= depth (the depth pad) can never match a
    # valid index, so they are written as zeros for free.
    tn, td = out_ref.shape
    off = pl.program_id(1) * td
    lane = jax.lax.broadcasted_iota(jnp.int32, (tn, td), 1) + off
    out_ref[...] = (idx_ref[...] == lane).astype(out_ref.dtype)


def one_hot(indices, depth, dtype=jnp.float32):
    """Pallas one-hot: integer `indices` (any shape) -> indices.shape + (depth,)."""
    if depth < 0:
        raise ValueError(f"depth must be non-negative, got {depth}")
    orig_shape = indices.shape
    if depth == 0:
        return jnp.zeros(orig_shape + (0,), dtype)
    flat = indices.reshape(-1).astype(jnp.int32)   # int64 indices truncated
    n = flat.shape[0]
    if n == 0:
        return jnp.zeros(orig_shape + (depth,), dtype)
    elem_bytes = jnp.dtype(dtype).itemsize

    if depth < _LANE and _LANE % depth == 0:
        # --- Lane-dense packed path: G = 128/depth one-hots per output row. ---
        groups = _LANE // depth
        rows = _cdiv(n, groups)
        n_pad = rows * groups
        if n_pad != n:
            # Tiny (< groups int32) pad so the (rows, groups) reshape works;
            # -1 never matches lane % depth, so padded rows come out zero.
            flat = jnp.pad(flat, (0, n_pad - n), constant_values=-1)
        idx2 = flat.reshape(rows, groups)
        expand = jnp.asarray(
            (np.arange(_LANE)[None, :] // depth
             == np.arange(groups)[:, None]).astype(np.float32))     # (groups, 128)

        tn = _pick_row_tile(rows, _LANE, elem_bytes)
        kernel = functools.partial(_one_hot_packed_kernel, depth=depth)
        out = pl.pallas_call(
            kernel,
            out_shape=jax.ShapeDtypeStruct((rows, _LANE), dtype),
            grid=(pl.cdiv(rows, tn),),
            in_specs=[pl.BlockSpec((tn, groups), lambda i: (i, 0)),
                      pl.BlockSpec((groups, _LANE), lambda i: (0, 0))],
            out_specs=pl.BlockSpec((tn, _LANE), lambda i: (i, 0)),
            compiler_params=pltpu.CompilerParams(
                dimension_semantics=("parallel",),
                vmem_limit_bytes=_VMEM_LIMIT_BYTES),
        )(idx2, expand)
        # Row-major (rows, G*depth) is bit-identical to (rows*G, depth): free reshape.
        out = out.reshape(rows * groups, depth)
        if n_pad != n:
            out = out[:n]                  # typically fuses into the consumer under jit
        return out.reshape(orig_shape + (depth,))

    # --- Generic path: lane-dense depth (padded to a multiple of 128). ---
    depth_pad = _round_up(depth, _LANE)
    if _SUBLANE * depth_pad * elem_bytes <= _TARGET_BLOCK_BYTES:
        td = depth_pad                     # single contiguous full-depth tile
    else:
        td = _LANE
        for cand in (512, 256):
            if depth_pad % cand == 0:
                td = cand
                break
    d_blocks = depth_pad // td

    tn = _pick_row_tile(n, td, elem_bytes)
    idx2 = flat.reshape(n, 1)

    out = pl.pallas_call(
        _one_hot_tiled_kernel,
        out_shape=jax.ShapeDtypeStruct((n, depth_pad), dtype),
        grid=(pl.cdiv(n, tn), d_blocks),
        in_specs=[pl.BlockSpec((tn, 1), lambda i, j: (i, 0))],
        out_specs=pl.BlockSpec((tn, td), lambda i, j: (i, j)),
        compiler_params=pltpu.CompilerParams(
            dimension_semantics=("parallel", "parallel"),
            vmem_limit_bytes=_VMEM_LIMIT_BYTES),
    )(idx2)
    if depth_pad != depth:
        out = out[:, :depth]               # pad lanes are zeros; slice fuses downstream
    return out.reshape(orig_shape + (depth,))


if __name__ == "__main__":
    key = jax.random.PRNGKey(0)

    # Small depth typical of the curiosity module (action one-hot):
    # exercises the lane-dense packed path (MXU expansion + single compare).
    depth = 32
    batch, seq = 2, 8
    indices = jax.random.randint(key, (batch, seq), minval=0, maxval=depth,
                                 dtype=jnp.int32)
    result = jax.block_until_ready(one_hot(indices, depth))
    ref = jax.nn.one_hot(indices, depth, dtype=jnp.float32)
    assert result.shape == (batch, seq, depth), result.shape
    assert result.dtype == jnp.float32, result.dtype
    assert bool(jnp.all(result == ref)), "mismatch vs reference (packed path)"

    # Packed path with n not divisible by groups (exercises the tiny input pad).
    depth_s = 8
    idx_s = jax.random.randint(jax.random.PRNGKey(2), (3, 5), minval=0,
                               maxval=depth_s, dtype=jnp.int32)
    res_s = jax.block_until_ready(one_hot(idx_s, depth_s))
    ref_s = jax.nn.one_hot(idx_s, depth_s, dtype=jnp.float32)
    assert bool(jnp.all(res_s == ref_s)), "mismatch vs reference (packed, ragged)"

    # Larger depth NOT divisible by 128: exercises the depth-padded generic path.
    depth2 = 1000
    idx2 = jax.random.randint(jax.random.PRNGKey(1), (batch, seq),
                              minval=0, maxval=depth2, dtype=jnp.int32)
    result2 = jax.block_until_ready(one_hot(idx2, depth2))
    ref2 = jax.nn.one_hot(idx2, depth2, dtype=jnp.float32)
    assert result2.shape == (batch, seq, depth2), result2.shape
    assert bool(jnp.all(result2 == ref2)), "mismatch vs reference (generic path)"

    print("KERNEL_OK")
</pallas_src>

<mosaic_0001>
module attributes {stable_mosaic.version = 11 : i64} {
  func.func @_one_hot_packed_kernel(%arg0: i32, %arg1: memref<4x4xi32, #tpu.memory_space<vmem>>, %arg2: memref<4x128xf32, #tpu.memory_space<vmem>>, %arg3: memref<4x128xf32, #tpu.memory_space<vmem>>) attributes {dimension_semantics = [#tpu.dimension_semantics<parallel>], iteration_bounds = array<i64: 1>, scalar_prefetch = 0 : i64, scratch_operands = 0 : i64, tpu.core_type = #tpu.core_type<tc>, window_params = [{transform_indices = @transform_0, window_bounds = array<i64: 4, 4>}, {pipeline_mode = #tpu.pipeline_mode<synchronous>, transform_indices = @transform_1, window_bounds = array<i64: 4, 128>}, {transform_indices = @transform_2, window_bounds = array<i64: 4, 128>}]} {
    %c0 = arith.constant 0 : index
    %c0_0 = arith.constant 0 : index
    %0 = vector.load %arg1[%c0, %c0_0] : memref<4x4xi32, #tpu.memory_space<vmem>>, vector<4x4xi32>
    %1 = arith.sitofp %0 : vector<4x4xi32> to vector<4x4xf32>
    %c0_1 = arith.constant 0 : index
    %c0_2 = arith.constant 0 : index
    %2 = vector.load %arg2[%c0_1, %c0_2] : memref<4x128xf32, #tpu.memory_space<vmem>>, vector<4x128xf32>
    %cst = arith.constant dense<0.000000e+00> : vector<4x128xf32>
    %3 = tpu.matmul %1, %2, %cst {dimension_numbers = #tpu.dot_dimension_numbers<[1], [0], [0], [1], [0, 0, 1, 1], [], []>} : vector<4x4xf32>, vector<4x128xf32>, vector<4x128xf32> -> vector<4x128xf32>
    %4 = tpu.iota {dimensions = array<i32: 1>} : vector<4x128xi32>
    %c32_i32 = arith.constant 32 : i32
    %c0_i32 = arith.constant 0 : i32
    %5 = arith.cmpi eq, %c32_i32, %c0_i32 : i32
    %c1_i32 = arith.constant 1 : i32
    %6 = arith.select %5, %c1_i32, %c32_i32 : i32
    %7 = vector.broadcast %6 : i32 to vector<4x128xi32>
    %8 = arith.remsi %4, %7 : vector<4x128xi32>
    %c0_i32_3 = arith.constant 0 : i32
    %9 = vector.broadcast %c0_i32_3 : i32 to vector<4x128xi32>
    %10 = arith.cmpi ne, %8, %9 : vector<4x128xi32>
    %c0_i32_4 = arith.constant 0 : i32
    %11 = vector.broadcast %c0_i32_4 : i32 to vector<4x128xi32>
    %12 = arith.cmpi slt, %8, %11 : vector<4x128xi32>
    %c0_i32_5 = arith.constant 0 : i32
    %13 = arith.cmpi slt, %6, %c0_i32_5 : i32
    %14 = vector.broadcast %13 : i1 to vector<4x128xi1>
    %15 = vector.broadcast %14 : vector<4x128xi1> to vector<4x128xi1>
    %16 = arith.xori %12, %15 : vector<4x128xi1>
    %17 = arith.andi %16, %10 : vector<4x128xi1>
    %18 = vector.broadcast %6 : i32 to vector<4x128xi32>
    %19 = arith.addi %8, %18 : vector<4x128xi32>
    %20 = arith.select %17, %19, %8 : vector<4x128xi1>, vector<4x128xi32>
    %21 = arith.sitofp %20 : vector<4x128xi32> to vector<4x128xf32>
    %22 = arith.cmpf oeq, %3, %21 : vector<4x128xf32>
    %23 = arith.extui %22 : vector<4x128xi1> to vector<4x128xi32>
    %24 = arith.sitofp %23 : vector<4x128xi32> to vector<4x128xf32>
    %c0_6 = arith.constant 0 : index
    %c0_7 = arith.constant 0 : index
    %25 = vector.load %arg3[%c0_6, %c0_7] : memref<4x128xf32, #tpu.memory_space<vmem>>, vector<4x128xf32>
    tpu.vector_store %arg3[%c0_6, %c0_7], %24 {strides = array<i32>} : memref<4x128xf32, #tpu.memory_space<vmem>>, vector<4x128xf32>,
    return
  }
  func.func @transform_0(%arg0: i32) -> (i32, i32) {
    %c0_i32 = arith.constant 0 : i32
    %c0_i32_0 = arith.constant 0 : i32
    return %arg0, %c0_i32 : i32, i32
  }
  func.func @transform_1(%arg0: i32) -> (i32, i32) {
    %c0_i32 = arith.constant 0 : i32
    %c0_i32_0 = arith.constant 0 : i32
    %c0_i32_1 = arith.constant 0 : i32
    return %c0_i32, %c0_i32_0 : i32, i32
  }
  func.func @transform_2(%arg0: i32) -> (i32, i32) {
    %c0_i32 = arith.constant 0 : i32
    %c0_i32_0 = arith.constant 0 : i32
    return %arg0, %c0_i32 : i32, i32
  }
}

</mosaic_0001>

<llo_original>
// kernel: tpu_custom_call.1
$region0: #{tpu_custom_call.1}
  #allocation0 [shape = 'u32[]', space=smem, size = 0x4, offset = 0x4, fixed_abs, tag = 'smem constant byte address 0x4 - core index']
  #allocation1 [shape = 'u32[72,128]{1,0:T(1,128)}', space=vmem, size = 0x9000, scoped, tag = 'internal scratch']
  %s0 = inlined_call_operand.hbm [shape: s32[4,4], index: 0, kind: input, shape index: {}]
  %s1 = inlined_call_operand.hbm [shape: f32[4,128], index: 1, kind: input, shape index: {}]
  %s2 = inlined_call_operand.hbm [shape: f32[4,128], index: 2, kind: output, shape index: {}]
  %s3 = sld [smem:[#allocation0]]
  $region26: #{tpu_custom_call.1} parent=0
    _
  %s5 = ssub.s32 1, %s3
  %s6 = scalar_select 0, %s5, %s3
  $region1: #{tpu_custom_call.1} parent=0
    #allocation2 [shape = 'u8[2048]{0}', space=vmem, size = 0x800, scoped, tag = 'input window, operand 0, single buffered']
    #allocation3 [shape = 's32[1]{0}', space=sflag, size = 0x4, scoped, tag = 'scoped memory for tpu_custom_call.1']
    #allocation4 [shape = 's32[1]{0}', space=sflag, size = 0x4, scoped, tag = 'scoped memory for tpu_custom_call.1']
    #allocation5 [shape = 'u8[2048]{0}', space=vmem, size = 0x800, scoped, tag = 'input window, operand 1, single buffered']
    #allocation6 [shape = 's32[1]{0}', space=sflag, size = 0x4, scoped, tag = 'scoped memory for tpu_custom_call.1']
    #allocation7 [shape = 'u8[2048]{0}', space=vmem, size = 0x800, scoped, tag = 'output window, operand 0, single buffered']
    %7 = vsyncpa [#allocation3], 0
    %8 = vsyncpa [#allocation6], 0
    %9 = vsyncpa [#allocation4], 0
    // Predicated region
    $region2: #{tpu_custom_call.1} parent=1 // pred_check
      _
    $region3: #{tpu_custom_call.1} parent=1 // pred_check_branch
      %11 = sbr.rel (0) target = $region5
    $region4: #{tpu_custom_call.1} parent=1 // pred_region
      %13 = vsyncadd [#allocation3], 0
      %s15 = sshll.u32 %s0, 4
      %s16 = int_to_ptr.hbm [resolvable:$true] %s15
      %s17 = sshll.u32 [#allocation2], 4
      %s18 = int_to_ptr.vmem [resolvable:$true] %s17
      %20 = dma.hbm_to_vmem [thread:$0]  %s16, 64, %s18, [#allocation3]
    $region5: #{tpu_custom_call.1} parent=1 // pred_fallthru
      _
    // Predicated region
    $region6: #{tpu_custom_call.1} parent=1 // pred_check
      _
    $region7: #{tpu_custom_call.1} parent=1 // pred_check_branch
      %22 = sbr.rel (0) target = $region9
    $region8: #{tpu_custom_call.1} parent=1 // pred_region
      %24 = vsyncadd [#allocation6], 0
      %s26 = sshll.u32 %s1, 4
      %s27 = int_to_ptr.hbm [resolvable:$true] %s26
      %s28 = sshll.u32 [#allocation5], 4
      %s29 = int_to_ptr.vmem [resolvable:$true] %s28
      %31 = dma.hbm_to_vmem [thread:$0]  %s27, 64, %s29, [#allocation6]
    $region9: #{tpu_custom_call.1} parent=1 // pred_fallthru
      _
    // Predicated region
    $region10: #{tpu_custom_call.1} parent=1 // pred_check
      _
    $region11: #{tpu_custom_call.1} parent=1 // pred_check_branch
      %33 = sbr.rel (0) target = $region13
    $region12: #{tpu_custom_call.1} parent=1 // pred_region
      %35 = dma.done [#allocation3], 64
    $region13: #{tpu_custom_call.1} parent=1 // pred_fallthru
      _
    // Predicated region
    $region14: #{tpu_custom_call.1} parent=1 // pred_check
      _
    $region15: #{tpu_custom_call.1} parent=1 // pred_check_branch
      %37 = sbr.rel (0) target = $region17
    $region16: #{tpu_custom_call.1} parent=1 // pred_region
      %39 = dma.done [#allocation6], 64
    $region17: #{tpu_custom_call.1} parent=1 // pred_fallthru
      _
    %v40 = vld [vmem:[#allocation2] sm:$0xf]
    %v41 = vcvt.s32.f32 %v40
    %v42 = vld [vmem:[#allocation5] sm:$0xf]
    %vm43 = vcmask 31744
    %v45 = vsel %vm43, %v41, 0
    %vm47 = vcmask 1043456
    %v49 = vsel %vm47, %v42, 0
    %51 = vmatpush.msra.mxu0 0.0
    %52 = vmatpush.msra.mxu0 0.0
    %53 = vmatpush.msra.mxu0 0.0
    %54 = vmatpush.msra.mxu0 0.0
    %55 = vmatpush.msra.mxu0 0.0
    %56 = vmatpush.msra.mxu0 0.0
    %57 = vmatpush.msra.mxu0 0.0
    %58 = vmatpush.msra.mxu0 0.0
    %59 = vmatpush.msra.mxu0 0.0
    %60 = vmatpush.msra.mxu0 0.0
    %61 = vmatpush.msra.mxu0 0.0
    %62 = vmatpush.msra.mxu0 0.0
    %63 = vmatpush.msra.mxu0 0.0
    %64 = vmatpush.msra.mxu0 0.0
    %65 = vmatpush.msra.mxu0 0.0
    %66 = vmatpush.msra.mxu0 %v49
    %67 = vmatmul.f32.gmra.mxu0 %v45
    %v68 = vpop.f32.mrf.mxu0
    %v69 = vadd.f32 0.0, %v68
    %70 = vdwg.mxu0
    %v71 = vlaneseq
    %v72 = vand.u32 %v71, 127
    %vm73 = vcmp.lt.s32.totalorder %v72, 0
    %v74 = vsub.s32 0, %v72
    %v75 = vsel %vm73, %v74, %v72
    %v76 = vshrl.u32 %v75, 5
    %v77 = vand.u32 %v75, 31
    %v78 = vsub.s32 0, %v77
    %v79 = vsel %vm73, %v78, %v77
    %vm80 = vcmp.ne.s32.totalorder %v79, 0
    %vm81 = vcmp.lt.s32.totalorder %v79, 0
    %vm82 = vmand %vm81, %vm80
    %v83 = vadd.s32 %v79, 32
    %v84 = vsel %vm82, %v83, %v79
    %v85 = vcvt.s32.f32 %v84
    %vm86 = vcmp.eq.f32.partialorder %v69, %v85
    %v87 = vsel %vm86, 1, 0
    %v88 = vcvt.s32.f32 %v87
    %89 = vst [vmem:[#allocation7] sm:$0xf] %v88
    // Predicated region
    $region18: #{tpu_custom_call.1} parent=1 // pred_check
      _
    $region19: #{tpu_custom_call.1} parent=1 // pred_check_branch
      %91 = sbr.rel (0) target = $region21
    $region20: #{tpu_custom_call.1} parent=1 // pred_region
      %93 = vsyncadd [#allocation4], 0
      %s95 = sshll.u32 [#allocation7], 4
      %s96 = int_to_ptr.vmem [resolvable:$true] %s95
      %s97 = sshll.u32 %s2, 4
      %s98 = int_to_ptr.hbm [resolvable:$true] %s97
      %100 = dma.vmem_to_hbm [thread:$0]  %s96, 64, %s98, [#allocation4]
    $region21: #{tpu_custom_call.1} parent=1 // pred_fallthru
      _
    // Predicated region
    $region22: #{tpu_custom_call.1} parent=1 // pred_check
      _
    $region23: #{tpu_custom_call.1} parent=1 // pred_check_branch
      %102 = sbr.rel (0) target = $region25
    $region24: #{tpu_custom_call.1} parent=1 // pred_region
      %104 = dma.done [#allocation4], 64
    $region25: #{tpu_custom_call.1} parent=1 // pred_fallthru
      _
    %105 = vsyncpa [#allocation3], 1
    %106 = vsyncpa [#allocation6], 1
    %107 = vsyncpa [#allocation4], 1

</llo_original>
